<compile_context>
chip_gen: v7x
topology: tpu7x:2x2x1
jax: 0.10.0
libtpu: 0.0.40
codegen_flags: <defaults>
</compile_context>

<pallas_src>
import jax
import jax.numpy as jnp
from jax.experimental import pallas as pl
from jax.experimental.pallas import tpu as pltpu


def _radial_kernel(x_ref, wbd_ref, bias_ref, o_ref):
    """One example chunk; all S samples in a single block-diagonal MXU matmul.

    x_ref    : (ec, S*K)   lane-dense input chunk
    wbd_ref  : (S*K, S*L)  resident block-diagonal noisy weight
    bias_ref : (1, S*L)    resident flat per-sample bias (f32)
    o_ref    : (ec, S*L)   lane-dense output block (single unmasked store)
    """
    acc = jnp.dot(x_ref[...], wbd_ref[...], preferred_element_type=jnp.float32)
    o_ref[...] = (acc + bias_ref[...]).astype(o_ref.dtype)


def sample_radial_noise(key, S, L, K):
    """Radial-BNN noise matching the PyTorch module:
    eps ~ Normal(0, std=0.5), L2-normalised over the out-feature axis (dim=1
    of the (S, L, K) / (S, L) tensors, exactly as in the module), rescaled by
    a per-sample radius r ~ N(0, 1)."""
    k1, k2, k3, k4 = jax.random.split(key, 4)

    w_eps_mfvi = 0.5 * jax.random.normal(k1, (S, L, K), dtype=jnp.float32)
    w_eps_norm = jnp.linalg.norm(w_eps_mfvi, axis=1, keepdims=True)        # (S,1,K)
    w_r = jax.random.normal(k2, (S,), dtype=jnp.float32)[:, None, None]
    w_eps = (w_eps_mfvi / w_eps_norm) * w_r                                # (S,L,K)

    b_eps_mfvi = 0.5 * jax.random.normal(k3, (S, L), dtype=jnp.float32)
    b_eps_norm = jnp.linalg.norm(b_eps_mfvi, axis=1, keepdims=True)        # (S,1)
    b_r = jax.random.normal(k4, (S,), dtype=jnp.float32)[:, None]
    bias_eps = (b_eps_mfvi / b_eps_norm) * b_r                             # (S,L)
    return w_eps, bias_eps


def _num_example_blocks(E):
    """Keep the whole example axis in one block unless it is large enough
    that (a) megacore sharding pays off (>= 256 rows per core, v7x only) or
    (b) the x/out tiles should be pipelined (~1024-row chunks)."""
    try:
        kind = jax.devices()[0].device_kind.lower()
    except Exception:
        kind = ""
    n_tc = 2 if ("v7" in kind or "tpu7" in kind) else 1

    G = 1
    if n_tc > 1 and E % n_tc == 0 and (E // n_tc) >= 256 and (E // n_tc) % 8 == 0:
        G = n_tc
    # Pipeline very large example axes in ~1024-row chunks.
    while (E // G) > 1024 and E % (G * 2) == 0 and (E // (G * 2)) % 8 == 0:
        G *= 2
    return G


def multi_sample_radial_forward(x, w_mu, w_rho, bias_mu, bias_rho, key,
                                *, num_example_blocks=None, mxu_dtype=None):
    """x: (examples, samples, in_features) -> (examples, samples, out_features)."""
    E, S, K = x.shape
    L = w_mu.shape[0]

    w_eps, bias_eps = sample_radial_noise(key, S, L, K)

    # --- Parameter-side precompute (O(S*L*K), independent of E; once/launch) ---
    w_std = jax.nn.softplus(w_rho)                                         # (L,K)
    w_all = w_mu[None] + w_std[None] * w_eps                               # (S,L,K) addcmul
    # Block-diagonal (S*K, S*L): block (s, s) = w_all[s]^T, zeros elsewhere.
    eye = jnp.eye(S, dtype=w_all.dtype)
    w_bd = jnp.einsum('st,slk->sktl', eye, w_all).reshape(S * K, S * L)

    bias = bias_mu[None, :] + jax.nn.softplus(bias_rho)[None, :] * bias_eps  # (S,L)
    bias_flat = bias.reshape(1, S * L)                                       # lane-dense

    # Lane-dense 2-D view of x (free metadata reshape; x is contiguous).
    x2d = x.reshape(E, S * K)

    if mxu_dtype is not None:
        # bf16 MXU operands on v6e/v7x for large compute-bound shapes;
        # accumulation (preferred_element_type) and bias add stay f32.
        x2d = x2d.astype(mxu_dtype)
        w_bd = w_bd.astype(mxu_dtype)

    G = num_example_blocks if num_example_blocks is not None else _num_example_blocks(E)
    if G < 1 or E % G != 0:
        G = 1
    ec = E // G

    out2d = pl.pallas_call(
        _radial_kernel,
        out_shape=jax.ShapeDtypeStruct((E, S * L), x.dtype),
        grid_spec=pltpu.PrefetchScalarGridSpec(
            num_scalar_prefetch=0,
            grid=(G,),
            in_specs=[
                pl.BlockSpec((ec, S * K), lambda c: (c, 0)),       # x (lane-dense)
                pl.BlockSpec((S * K, S * L), lambda c: (0, 0)),    # W_bd (resident)
                pl.BlockSpec((1, S * L), lambda c: (0, 0)),        # flat bias (resident)
            ],
            out_specs=pl.BlockSpec((ec, S * L), lambda c: (c, 0)),
        ),
        compiler_params=pltpu.CompilerParams(
            dimension_semantics=("parallel",),
        ),
    )(x2d, w_bd, bias_flat)

    # Free metadata reshape (contiguous): (E, S*L) -> (E, S, L).
    out = out2d.reshape(E, S, L)

    # TODO(synk): kl_divergence (log posterior / prior) is not computed -- the
    # Gaussian prior class is not part of the provided module code and the
    # forward's return value does not depend on it.
    return out


if __name__ == "__main__":
    key = jax.random.PRNGKey(0)
    k_wmu, k_wrho, k_bmu, k_brho, k_x, k_noise = jax.random.split(key, 6)

    # small shapes consistent with the module: (examples, samples, in_features)
    E, S, K, L = 2, 8, 32, 16

    # deterministic parameter init matching __init__ ranges
    w_mu = jax.random.uniform(k_wmu, (L, K), jnp.float32, -0.2, 0.2)
    w_rho = jax.random.uniform(k_wrho, (L, K), jnp.float32, -5.0, -4.0)
    bias_mu = jax.random.uniform(k_bmu, (L,), jnp.float32, -0.2, 0.2)
    bias_rho = jax.random.uniform(k_brho, (L,), jnp.float32, -5.0, -4.0)
    x = jax.random.normal(k_x, (E, S, K), dtype=jnp.float32)

    fwd = jax.jit(multi_sample_radial_forward)
    out = jax.block_until_ready(fwd(x, w_mu, w_rho, bias_mu, bias_rho, k_noise))

    # Pure-JAX reference with the same sampled noise (test harness only; not
    # part of the production forward path).
    w_eps, bias_eps = sample_radial_noise(k_noise, S, L, K)
    w = w_mu[None] + jax.nn.softplus(w_rho)[None] * w_eps                  # (S,L,K)
    b = bias_mu[None, :] + jax.nn.softplus(bias_rho)[None, :] * bias_eps   # (S,L)
    ref = jnp.einsum('ijk,jlk->ijl', x, w) + b[None, :, :]                 # (E,S,L)
    ref = jax.block_until_ready(ref)

    assert out.shape == (E, S, L)
    max_err = jnp.max(jnp.abs(out - ref))
    assert jnp.allclose(out, ref, atol=1e-5, rtol=1e-5), f"max err {max_err}"
    print("KERNEL_OK")
</pallas_src>

<mosaic_0001>
module attributes {stable_mosaic.version = 11 : i64} {
  func.func @_radial_kernel(%arg0: i32, %arg1: memref<2x256xf32, #tpu.memory_space<vmem>>, %arg2: memref<256x128xf32, #tpu.memory_space<vmem>>, %arg3: memref<1x128xf32, #tpu.memory_space<vmem>>, %arg4: memref<2x128xf32, #tpu.memory_space<vmem>>) attributes {dimension_semantics = [#tpu.dimension_semantics<parallel>], iteration_bounds = array<i64: 1>, scalar_prefetch = 0 : i64, scratch_operands = 0 : i64, tpu.core_type = #tpu.core_type<tc>, window_params = [{transform_indices = @transform_0, window_bounds = array<i64: 2, 256>}, {pipeline_mode = #tpu.pipeline_mode<synchronous>, transform_indices = @transform_1, window_bounds = array<i64: 256, 128>}, {pipeline_mode = #tpu.pipeline_mode<synchronous>, transform_indices = @transform_2, window_bounds = array<i64: 1, 128>}, {transform_indices = @transform_3, window_bounds = array<i64: 2, 128>}]} {
    %c0 = arith.constant 0 : index
    %c0_0 = arith.constant 0 : index
    %0 = vector.load %arg1[%c0, %c0_0] : memref<2x256xf32, #tpu.memory_space<vmem>>, vector<2x256xf32>
    %c0_1 = arith.constant 0 : index
    %c0_2 = arith.constant 0 : index
    %1 = vector.load %arg2[%c0_1, %c0_2] : memref<256x128xf32, #tpu.memory_space<vmem>>, vector<256x128xf32>
    %cst = arith.constant dense<0.000000e+00> : vector<2x128xf32>
    %2 = tpu.matmul %0, %1, %cst {dimension_numbers = #tpu.dot_dimension_numbers<[1], [0], [0], [1], [0, 0, 1, 1], [], []>} : vector<2x256xf32>, vector<256x128xf32>, vector<2x128xf32> -> vector<2x128xf32>
    %c0_3 = arith.constant 0 : index
    %c0_4 = arith.constant 0 : index
    %3 = vector.load %arg3[%c0_3, %c0_4] : memref<1x128xf32, #tpu.memory_space<vmem>>, vector<1x128xf32>
    %4 = vector.broadcast %3 : vector<1x128xf32> to vector<2x128xf32>
    %5 = arith.addf %2, %4 : vector<2x128xf32>
    %c0_5 = arith.constant 0 : index
    %c0_6 = arith.constant 0 : index
    %6 = vector.load %arg4[%c0_5, %c0_6] : memref<2x128xf32, #tpu.memory_space<vmem>>, vector<2x128xf32>
    tpu.vector_store %arg4[%c0_5, %c0_6], %5 {strides = array<i32>} : memref<2x128xf32, #tpu.memory_space<vmem>>, vector<2x128xf32>,
    return
  }
  func.func @transform_0(%arg0: i32) -> (i32, i32) {
    %c0_i32 = arith.constant 0 : i32
    %c0_i32_0 = arith.constant 0 : i32
    return %arg0, %c0_i32 : i32, i32
  }
  func.func @transform_1(%arg0: i32) -> (i32, i32) {
    %c0_i32 = arith.constant 0 : i32
    %c0_i32_0 = arith.constant 0 : i32
    %c0_i32_1 = arith.constant 0 : i32
    return %c0_i32, %c0_i32_0 : i32, i32
  }
  func.func @transform_2(%arg0: i32) -> (i32, i32) {
    %c0_i32 = arith.constant 0 : i32
    %c0_i32_0 = arith.constant 0 : i32
    %c0_i32_1 = arith.constant 0 : i32
    return %c0_i32, %c0_i32_0 : i32, i32
  }
  func.func @transform_3(%arg0: i32) -> (i32, i32) {
    %c0_i32 = arith.constant 0 : i32
    %c0_i32_0 = arith.constant 0 : i32
    return %arg0, %c0_i32 : i32, i32
  }
}

</mosaic_0001>

<llo_original>
// kernel: multi_sample_radial_forward.1
$region0: #{multi_sample_radial_forward.1}
  #allocation0 [shape = 'u32[]', space=smem, size = 0x4, offset = 0x4, fixed_abs, tag = 'smem constant byte address 0x4 - core index']
  #allocation1 [shape = 'u32[144,128]{1,0:T(1,128)}', space=vmem, size = 0x12000, scoped, tag = 'internal scratch']
  %s0 = inlined_call_operand.vmem [shape: f32[2,256], index: 0, kind: input, shape index: {}]
  %s1 = inlined_call_operand.vmem [shape: f32[256,128], index: 1, kind: input, shape index: {}]
  %s2 = inlined_call_operand.vmem [shape: f32[1,128], index: 2, kind: input, shape index: {}]
  %s3 = inlined_call_operand.vmem [shape: f32[2,128], index: 3, kind: output, shape index: {}]
  %s4 = sld [smem:[#allocation0]]
  $region22: #{multi_sample_radial_forward.1} parent=0
    _
  %s6 = ssub.s32 1, %s4
  %s7 = scalar_select 0, %s6, %s4
  // Predicated region
  $region2: #{multi_sample_radial_forward.1} parent=0 // pred_check
    _
  $region3: #{multi_sample_radial_forward.1} parent=0 // pred_check_branch
    %9 = sbr.rel (0) target = $region5
  $region4: #{multi_sample_radial_forward.1} parent=0 // pred_region
    _
  $region5: #{multi_sample_radial_forward.1} parent=0 // pred_fallthru
    _
  // Predicated region
  $region6: #{multi_sample_radial_forward.1} parent=0 // pred_check
    _
  $region7: #{multi_sample_radial_forward.1} parent=0 // pred_check_branch
    %11 = sbr.rel (0) target = $region9
  $region8: #{multi_sample_radial_forward.1} parent=0 // pred_region
    _
  $region9: #{multi_sample_radial_forward.1} parent=0 // pred_fallthru
    _
  // Predicated region
  $region10: #{multi_sample_radial_forward.1} parent=0 // pred_check
    _
  $region11: #{multi_sample_radial_forward.1} parent=0 // pred_check_branch
    %13 = sbr.rel (0) target = $region13
  $region12: #{multi_sample_radial_forward.1} parent=0 // pred_region
    _
  $region13: #{multi_sample_radial_forward.1} parent=0 // pred_fallthru
    _
  %v14 = vld [vmem:[%s0] sm:$0xf]
  %v15 = vld [vmem:[%s1] sm:$0xff]
  %v16 = vld [vmem:[%s1 + $0x8] sm:$0xff]
  %v17 = vld [vmem:[%s1 + $0x10] sm:$0xff]
  %v18 = vld [vmem:[%s1 + $0x18] sm:$0xff]
  %v19 = vld [vmem:[%s1 + $0x20] sm:$0xff]
  %v20 = vld [vmem:[%s1 + $0x28] sm:$0xff]
  %v21 = vld [vmem:[%s1 + $0x30] sm:$0xff]
  %v22 = vld [vmem:[%s1 + $0x38] sm:$0xff]
  %v23 = vld [vmem:[%s1 + $0x40] sm:$0xff]
  %v24 = vld [vmem:[%s1 + $0x48] sm:$0xff]
  %v25 = vld [vmem:[%s1 + $0x50] sm:$0xff]
  %v26 = vld [vmem:[%s1 + $0x58] sm:$0xff]
  %v27 = vld [vmem:[%s1 + $0x60] sm:$0xff]
  %v28 = vld [vmem:[%s1 + $0x68] sm:$0xff]
  %v29 = vld [vmem:[%s1 + $0x70] sm:$0xff]
  %v30 = vld [vmem:[%s1 + $0x78] sm:$0xff]
  %v31 = vld [vmem:[%s1 + $0x80] sm:$0xff]
  %v32 = vld [vmem:[%s1 + $0x88] sm:$0xff]
  %v33 = vld [vmem:[%s1 + $0x90] sm:$0xff]
  %v34 = vld [vmem:[%s1 + $0x98] sm:$0xff]
  %v35 = vld [vmem:[%s1 + $0xa0] sm:$0xff]
  %v36 = vld [vmem:[%s1 + $0xa8] sm:$0xff]
  %v37 = vld [vmem:[%s1 + $0xb0] sm:$0xff]
  %v38 = vld [vmem:[%s1 + $0xb8] sm:$0xff]
  %v39 = vld [vmem:[%s1 + $0xc0] sm:$0xff]
  %v40 = vld [vmem:[%s1 + $0xc8] sm:$0xff]
  %v41 = vld [vmem:[%s1 + $0xd0] sm:$0xff]
  %v42 = vld [vmem:[%s1 + $0xd8] sm:$0xff]
  %v43 = vld [vmem:[%s1 + $0xe0] sm:$0xff]
  %v44 = vld [vmem:[%s1 + $0xe8] sm:$0xff]
  %v45 = vld [vmem:[%s1 + $0xf0] sm:$0xff]
  %v46 = vld [vmem:[%s1 + $0xf8] sm:$0xff]
  %v47 = vld [vmem:[%s2] sm:$0x1]
  %v49 = vlaneseq
  %v50 = vshrl.u32 %v49, 7
  %v51 = vsub.s32 0, %v50
  %v52 = vrot.slane %v47, %v51
  %v56 = vunpack.c.l.s4 1983009808
  %v57 = vunpack.c.0.s8 %v56
  %v58 = vlaneseq
  %v59 = vshrl.u32 %v58, 7
  %v60 = vsub.s32 %v57, %v59
  %v61 = vrot.slane %v14, %v60
  %v62 = vcombine.high %v61, %v61
  %65 = vmatprep.subr.mxu0 0.0
  %66 = vmatpush1.msra.mxu0 %v15
  %67 = vmatprep.subr.mxu0 0.0
  %68 = vmatpush1.msra.mxu0 %v16
  %69 = vmatprep.subr.mxu0 0.0
  %70 = vmatpush1.msra.mxu0 %v17
  %71 = vmatprep.subr.mxu0 0.0
  %72 = vmatpush1.msra.mxu0 %v18
  %73 = vmatprep.subr.mxu0 0.0
  %74 = vmatpush1.msra.mxu0 %v19
  %75 = vmatprep.subr.mxu0 0.0
  %76 = vmatpush1.msra.mxu0 %v20
  %77 = vmatprep.subr.mxu0 0.0
  %78 = vmatpush1.msra.mxu0 %v21
  %79 = vmatprep.subr.mxu0 0.0
  %80 = vmatpush1.msra.mxu0 %v22
  %81 = vmatprep.subr.mxu0 0.0
  %82 = vmatpush1.msra.mxu0 %v23
  %83 = vmatprep.subr.mxu0 0.0
  %84 = vmatpush1.msra.mxu0 %v24
  %85 = vmatprep.subr.mxu0 0.0
  %86 = vmatpush1.msra.mxu0 %v25
  %87 = vmatprep.subr.mxu0 0.0
  %88 = vmatpush1.msra.mxu0 %v26
  %89 = vmatprep.subr.mxu0 0.0
  %90 = vmatpush1.msra.mxu0 %v27
  %91 = vmatprep.subr.mxu0 0.0
  %92 = vmatpush1.msra.mxu0 %v28
  %93 = vmatprep.subr.mxu0 0.0
  %94 = vmatpush1.msra.mxu0 %v29
  %95 = vmatprep.subr.mxu0 0.0
  %96 = vmatpush1.msra.mxu0 %v30
  %97 = vmatprep.subr.mxu0 0.0
  %98 = vmatpush1.msra.mxu0 %v31
  %99 = vmatprep.subr.mxu0 0.0
  %100 = vmatpush1.msra.mxu0 %v32
  %101 = vmatprep.subr.mxu0 0.0
  %102 = vmatpush1.msra.mxu0 %v33
  %103 = vmatprep.subr.mxu0 0.0
  %104 = vmatpush1.msra.mxu0 %v34
  %105 = vmatprep.subr.mxu0 0.0
  %106 = vmatpush1.msra.mxu0 %v35
  %107 = vmatprep.subr.mxu0 0.0
  %108 = vmatpush1.msra.mxu0 %v36
  %109 = vmatprep.subr.mxu0 0.0
  %110 = vmatpush1.msra.mxu0 %v37
  %111 = vmatprep.subr.mxu0 0.0
  %112 = vmatpush1.msra.mxu0 %v38
  %113 = vmatprep.subr.mxu0 0.0
  %114 = vmatpush1.msra.mxu0 %v39
  %115 = vmatprep.subr.mxu0 0.0
  %116 = vmatpush1.msra.mxu0 %v40
  %117 = vmatprep.subr.mxu0 0.0
  %118 = vmatpush1.msra.mxu0 %v41
  %119 = vmatprep.subr.mxu0 0.0
  %120 = vmatpush1.msra.mxu0 %v42
  %121 = vmatprep.subr.mxu0 0.0
  %122 = vmatpush1.msra.mxu0 %v43
  %123 = vmatprep.subr.mxu0 0.0
  %124 = vmatpush1.msra.mxu0 %v44
  %125 = vmatprep.subr.mxu0 0.0
  %126 = vmatpush1.msra.mxu0 %v45
  %127 = vmatprep.subr.mxu0 0.0
  %128 = vmatpush1.msra.mxu0 %v46
  %129 = vmatprep.mubr.f32.mxu0 %v62
  %130 = vmatmul.mubr.f32.gmra.mrb[0].mxu0 %v61
  %v131 = vpop.f32.mrb[0].mxu0
  %v132 = vadd.f32 %v52, %v131
  %v133 = vpop.f32.mrb[0].mxu0
  %134 = vdwg.mxu0
  %135 = vst [vmem:[%s3] sm:$0x3] %v132
  // Predicated region
  $region14: #{multi_sample_radial_forward.1} parent=0 // pred_check
    _
  $region15: #{multi_sample_radial_forward.1} parent=0 // pred_check_branch
    %137 = sbr.rel (0) target = $region17
  $region16: #{multi_sample_radial_forward.1} parent=0 // pred_region
    _
  $region17: #{multi_sample_radial_forward.1} parent=0 // pred_fallthru
    _
  // Predicated region
  $region18: #{multi_sample_radial_forward.1} parent=0 // pred_check
    _
  $region19: #{multi_sample_radial_forward.1} parent=0 // pred_check_branch
    %139 = sbr.rel (0) target = $region21
  $region20: #{multi_sample_radial_forward.1} parent=0 // pred_region
    _
  $region21: #{multi_sample_radial_forward.1} parent=0 // pred_fallthru
    _

</llo_original>
